<compile_context>
chip_gen: v5e
topology: v5e:2x2
jax: 0.10.0
libtpu: 0.0.40
codegen_flags: <defaults>
</compile_context>

<pallas_src>
import jax
import jax.numpy as jnp
from jax.experimental import pallas as pl
from jax.experimental.pallas import tpu as pltpu

HIDDEN_SIZE = 8
TOP_K = 6
INPUT_SIZE = TOP_K * 2        # 12
OUTPUT_SIZE = 3

GATE_DIM = 4 * HIDDEN_SIZE    # 32  (i, f, g, o)
XH_DIM = 24                   # x(12) + h(8) + 4 zero pad (sublane-aligned to 8)
PACK_IN = XH_DIM + HIDDEN_SIZE  # 32 : packed activation row [x, h, pad, c]

# Packed weight-slab row offsets (all slice starts are multiples of 8).
FC_ROW = 24                   # rows 24:32  -> W_fc^T  (cols 0:OUTPUT_SIZE)
B_ROW = 32                    # row  32     -> b_ih + b_hh
BFC_ROW = 40                  # row  40     -> b_fc    (cols 0:OUTPUT_SIZE)
HH_ROW = 48                   # rows 48:56  -> W_hh^T  (used by seq kernel)
W_ROWS = 56

# Packed output layout of the single-step kernel (single lane-padded row).
PACK_OUT = 128
Y_OFF = 0                     # lanes  0:32  sigmoid(fc) (lanes 0:OUTPUT_SIZE valid)
H_OFF = 32                    # lanes 32:40  new hidden
C_OFF = 40                    # lanes 40:48  new cell


def _vmem_spec():
    return pl.BlockSpec(memory_space=pltpu.MemorySpace.VMEM)


def _sigmoid(x):
    # Guaranteed single-EUP lowering (tanh form of the logistic); keeps any
    # exp + VPU-divide path off the serial recurrence chain.
    return 0.5 * jnp.tanh(0.5 * x) + 0.5


# --------------------------------------------------------------------------
# Single-step kernel: exactly LSTMModel.forward (one cell step + fc + sigmoid)
# --------------------------------------------------------------------------
def lstm_step_kernel(vec_ref, w_ref, out_ref):
    """vec_ref: (1, 32) = [x(12), h(8), 0(4), c(8)]
       w_ref:   (56, 32) packed weight slab (see row-offset constants)
       out_ref: (1, 128) = [y(32, lanes 0:3 valid), h_new(8), c_new(8), 0...]"""
    H = HIDDEN_SIZE
    vec = vec_ref[...]                                   # (1, 32)
    xh = vec[:, 0:XH_DIM]                                # (1, 24)
    c = vec[:, XH_DIM:PACK_IN]                           # (1, 8)

    w_gate = w_ref[0:XH_DIM, :]                          # (24, 32) [Wih^T; Whh^T; 0]
    w_fc = w_ref[FC_ROW:FC_ROW + H, :]                   # (8, 32), cols 0:3 valid
    b = w_ref[B_ROW:B_ROW + 1, :]                        # (1, 32)
    bfc = w_ref[BFC_ROW:BFC_ROW + 1, :]                  # (1, 32)

    # Fused gate matmul: x @ Wih^T + h @ Whh^T + (b_ih + b_hh) in one dot.
    gates = jnp.dot(xh, w_gate, preferred_element_type=jnp.float32) + b

    sig = _sigmoid(gates)                                # one full-width EUP pass
    g = jnp.tanh(gates[:, 2 * H:3 * H])                  # tanh straight from gates vreg
    c_new = sig[:, H:2 * H] * c + sig[:, 0:H] * g
    h_new = sig[:, 3 * H:4 * H] * jnp.tanh(c_new)

    logits = jnp.dot(h_new, w_fc, preferred_element_type=jnp.float32) + bfc
    # Lanes 3:32 of y hold sigmoid(0)=0.5 garbage; sliced off in the wrapper.
    y = _sigmoid(logits)                                 # (1, 32)

    # Build the whole 128-lane output row in registers -> ONE unmasked store.
    pad = jnp.zeros((1, PACK_OUT - GATE_DIM - 2 * H), jnp.float32)
    out_ref[...] = jnp.concatenate([y, h_new, c_new, pad], axis=-1)


def lstm_model_forward(x, hidden, cell, w_slab):
    """Functional LSTMModel.forward: one LSTM step + Linear + sigmoid.

    Returns (out (1, OUTPUT_SIZE), (new_hidden, new_cell)) with hidden/cell
    shaped (1, 1, HIDDEN_SIZE), matching the PyTorch module.
    """
    x2d = jnp.reshape(x, (1, INPUT_SIZE)).astype(jnp.float32)
    h2d = jnp.reshape(hidden, (1, HIDDEN_SIZE)).astype(jnp.float32)
    c2d = jnp.reshape(cell, (1, HIDDEN_SIZE)).astype(jnp.float32)
    pad = jnp.zeros((1, XH_DIM - INPUT_SIZE - HIDDEN_SIZE), jnp.float32)
    vec = jnp.concatenate([x2d, h2d, pad, c2d], axis=-1)  # (1, 32): one input DMA

    out = pl.pallas_call(
        lstm_step_kernel,
        out_shape=jax.ShapeDtypeStruct((1, PACK_OUT), jnp.float32),
        in_specs=[_vmem_spec(), _vmem_spec()],
        out_specs=_vmem_spec(),
    )(vec, w_slab)

    y = out[:, Y_OFF:Y_OFF + OUTPUT_SIZE]
    h_new = out[:, H_OFF:H_OFF + HIDDEN_SIZE].reshape(1, 1, HIDDEN_SIZE)
    c_new = out[:, C_OFF:C_OFF + HIDDEN_SIZE].reshape(1, 1, HIDDEN_SIZE)
    return y, (h_new, c_new)


def lstm_model_scan(xs, w_slab):
    """Drives the single-step kernel via lax.scan (state stays on device; no
    per-step host dispatch). Prefer lstm_model_forward_sequence when possible."""
    def body(carry, x_row):
        h, c = carry
        y, (h, c) = lstm_model_forward(x_row, h, c, w_slab)
        return (h, c), y[0]

    h0 = jnp.zeros((1, 1, HIDDEN_SIZE), jnp.float32)
    c0 = jnp.zeros((1, 1, HIDDEN_SIZE), jnp.float32)
    (h, c), ys = jax.lax.scan(body, (h0, c0), xs)
    return ys, (h, c)


# --------------------------------------------------------------------------
# Sequence-fused kernel: T forward() calls inside ONE pallas_call.
#   - x-projection hoisted to one batched matmul before the recurrence
#   - FC head + sigmoid deferred to one batched matmul after the recurrence
#   - recurrence statically unrolled; h/c live in registers
#   - weights DMA'd once for the whole sequence
# State starts at zero (== module right after reset()).
# --------------------------------------------------------------------------
def lstm_seq_kernel(xs_ref, w_ref, ys_ref, state_ref):
    """xs_ref:    (T, 24)  row t = [x_t(12), zeros(12..24)]
       w_ref:     (56, 32) packed weight slab
       ys_ref:    (T, 32)  per-step sigmoid(fc) (lanes 0:OUTPUT_SIZE valid)
       state_ref: (1, 32)  final [h(8), c(8), zeros]"""
    H = HIDDEN_SIZE
    T = ys_ref.shape[0]

    w_gate = w_ref[0:XH_DIM, :]                          # (24, 32); h-lane rows unused (x pads are 0)
    w_hh = w_ref[HH_ROW:HH_ROW + H, :]                   # (8, 32)
    w_fc = w_ref[FC_ROW:FC_ROW + H, :]                   # (8, 32)
    b = w_ref[B_ROW:B_ROW + 1, :]                        # (1, 32)
    bfc = w_ref[BFC_ROW:BFC_ROW + 1, :]                  # (1, 32)

    # (1) Hoisted x-projection: one (T,24)@(24,32) matmul for ALL timesteps.
    gates_x = jnp.dot(xs_ref[...], w_gate,
                      preferred_element_type=jnp.float32) + b      # (T, 32)

    # (2) Serial recurrence: only h @ Whh^T + elementwise math per step.
    #     Statically unrolled (T is small and known at trace time).
    h = jnp.zeros((1, H), jnp.float32)
    c = jnp.zeros((1, H), jnp.float32)
    h_rows = []
    for t in range(T):
        gt = gates_x[t:t + 1, :] + jnp.dot(
            h, w_hh, preferred_element_type=jnp.float32)           # (1, 32)
        sig = _sigmoid(gt)
        g = jnp.tanh(gt[:, 2 * H:3 * H])
        c = sig[:, H:2 * H] * c + sig[:, 0:H] * g
        h = sig[:, 3 * H:4 * H] * jnp.tanh(c)
        h_rows.append(h)

    # (3) Deferred FC head: one (T,8)@(8,32) matmul + one sigmoid + one store.
    hs = jnp.concatenate(h_rows, axis=0)                           # (T, 8)
    logits = jnp.dot(hs, w_fc, preferred_element_type=jnp.float32) + bfc
    # Lanes 3:32 of each row hold sigmoid(0)=0.5 garbage; sliced in the wrapper.
    ys_ref[...] = _sigmoid(logits)

    # Final state: single full-width store of [h, c, 0...].
    state_ref[...] = jnp.concatenate(
        [h, c, jnp.zeros((1, GATE_DIM - 2 * H), jnp.float32)], axis=-1)


def lstm_model_forward_sequence(xs, w_slab):
    """Equivalent to calling forward() once per row of xs starting from a
    freshly reset (zero) hidden/cell state. Returns (ys (T, OUTPUT_SIZE),
    (hidden, cell)) with hidden/cell shaped (1, 1, HIDDEN_SIZE)."""
    xs2d = jnp.reshape(xs, (-1, INPUT_SIZE)).astype(jnp.float32)
    T = xs2d.shape[0]
    xs_pad = jnp.zeros((T, XH_DIM), jnp.float32).at[:, :INPUT_SIZE].set(xs2d)

    ys, state = pl.pallas_call(
        lstm_seq_kernel,
        out_shape=(jax.ShapeDtypeStruct((T, GATE_DIM), jnp.float32),
                   jax.ShapeDtypeStruct((1, GATE_DIM), jnp.float32)),
        in_specs=[_vmem_spec(), _vmem_spec()],
        out_specs=(_vmem_spec(), _vmem_spec()),
    )(xs_pad, w_slab)

    y = ys[:, :OUTPUT_SIZE]
    h = state[:, 0:HIDDEN_SIZE].reshape(1, 1, HIDDEN_SIZE)
    c = state[:, HIDDEN_SIZE:2 * HIDDEN_SIZE].reshape(1, 1, HIDDEN_SIZE)
    return y, (h, c)


# --------------------------------------------------------------------------
# Parameter init / one-time packing / pure-JAX reference
# --------------------------------------------------------------------------
def init_params(key):
    """Mimics nn.LSTM / nn.Linear uniform(-1/sqrt(H), 1/sqrt(H)) init."""
    ks = jax.random.split(key, 6)
    bound = 1.0 / jnp.sqrt(HIDDEN_SIZE)
    u = lambda k, shape: jax.random.uniform(k, shape, jnp.float32, -bound, bound)
    return {
        "w_ih": u(ks[0], (4 * HIDDEN_SIZE, INPUT_SIZE)),
        "w_hh": u(ks[1], (4 * HIDDEN_SIZE, HIDDEN_SIZE)),
        "b_ih": u(ks[2], (4 * HIDDEN_SIZE,)),
        "b_hh": u(ks[3], (4 * HIDDEN_SIZE,)),
        "w_fc": u(ks[4], (OUTPUT_SIZE, HIDDEN_SIZE)),
        "b_fc": u(ks[5], (OUTPUT_SIZE,)),
    }


def pack_params(params):
    """One-time packing of all weights/biases into a single (56, 32) slab."""
    w = jnp.zeros((W_ROWS, GATE_DIM), jnp.float32)
    w = w.at[0:INPUT_SIZE, :].set(params["w_ih"].T.astype(jnp.float32))
    w = w.at[INPUT_SIZE:INPUT_SIZE + HIDDEN_SIZE, :].set(
        params["w_hh"].T.astype(jnp.float32))
    w = w.at[FC_ROW:FC_ROW + HIDDEN_SIZE, 0:OUTPUT_SIZE].set(
        params["w_fc"].T.astype(jnp.float32))
    w = w.at[B_ROW, :].set((params["b_ih"] + params["b_hh"]).astype(jnp.float32))
    w = w.at[BFC_ROW, 0:OUTPUT_SIZE].set(params["b_fc"].astype(jnp.float32))
    w = w.at[HH_ROW:HH_ROW + HIDDEN_SIZE, :].set(
        params["w_hh"].T.astype(jnp.float32))
    return w


def _reference_step(x_row, h, c, params):
    """Pure-JAX reference for one forward() call."""
    gates = (x_row @ params["w_ih"].T + params["b_ih"]
             + h @ params["w_hh"].T + params["b_hh"])
    H = HIDDEN_SIZE
    i = jax.nn.sigmoid(gates[:, 0:H])
    f = jax.nn.sigmoid(gates[:, H:2 * H])
    g = jnp.tanh(gates[:, 2 * H:3 * H])
    o = jax.nn.sigmoid(gates[:, 3 * H:4 * H])
    c_new = f * c + i * g
    h_new = o * jnp.tanh(c_new)
    y = jax.nn.sigmoid(h_new @ params["w_fc"].T + params["b_fc"])
    return y, h_new, c_new


if __name__ == "__main__":
    key = jax.random.PRNGKey(0)
    k_param, k_x = jax.random.split(key)

    params = init_params(k_param)
    w_slab = pack_params(params)          # packed once, reused every call

    SEQ_LEN = 8
    xs = jax.random.normal(k_x, (SEQ_LEN, INPUT_SIZE), dtype=jnp.float32)

    seq_fn = jax.jit(lstm_model_forward_sequence)
    scan_fn = jax.jit(lstm_model_scan)

    # Preferred path: the full T-step recurrence fused into ONE pallas_call
    # (state kept on-chip, weights loaded once, x-projection / FC batched).
    ys_seq, (h_seq, c_seq) = seq_fn(xs, w_slab)
    jax.block_until_ready((ys_seq, h_seq, c_seq))

    # Step-kernel path (matches LSTMModel.forward), driven by lax.scan so the
    # recurrent state never round-trips through host Python.
    ys_step, (h_step, c_step) = scan_fn(xs, w_slab)
    jax.block_until_ready((ys_step, h_step, c_step))

    # Correctness vs. pure-JAX reference.
    h_r = jnp.zeros((1, HIDDEN_SIZE), jnp.float32)
    c_r = jnp.zeros((1, HIDDEN_SIZE), jnp.float32)
    ys_ref = []
    for t in range(SEQ_LEN):
        y_r, h_r, c_r = _reference_step(xs[t:t + 1], h_r, c_r, params)
        ys_ref.append(y_r)
    ys_ref = jnp.concatenate(ys_ref, axis=0)

    assert ys_seq.shape == (SEQ_LEN, OUTPUT_SIZE)
    assert ys_step.shape == (SEQ_LEN, OUTPUT_SIZE)
    assert jnp.allclose(ys_seq, ys_ref, atol=1e-4), "sequence outputs mismatch"
    assert jnp.allclose(ys_step, ys_ref, atol=1e-4), "step outputs mismatch"
    assert jnp.allclose(h_seq.reshape(1, -1), h_r, atol=1e-4), "seq hidden mismatch"
    assert jnp.allclose(c_seq.reshape(1, -1), c_r, atol=1e-4), "seq cell mismatch"
    assert jnp.allclose(h_step.reshape(1, -1), h_r, atol=1e-4), "step hidden mismatch"
    assert jnp.allclose(c_step.reshape(1, -1), c_r, atol=1e-4), "step cell mismatch"

    print("KERNEL_OK")
</pallas_src>

<mosaic_0001>
module attributes {stable_mosaic.version = 11 : i64} {
  func.func @lstm_seq_kernel(%arg0: memref<8x24xf32, #tpu.memory_space<vmem>>, %arg1: memref<56x32xf32, #tpu.memory_space<vmem>>, %arg2: memref<8x32xf32, #tpu.memory_space<vmem>>, %arg3: memref<1x32xf32, #tpu.memory_space<vmem>>) attributes {dimension_semantics = [], scalar_prefetch = 0 : i64, scratch_operands = 0 : i64, tpu.core_type = #tpu.core_type<tc>} {
    %c0 = arith.constant 0 : index
    %c0_0 = arith.constant 0 : index
    %0 = vector.load %arg1[%c0, %c0_0] : memref<56x32xf32, #tpu.memory_space<vmem>>, vector<24x32xf32>
    %c48 = arith.constant 48 : index
    %c0_1 = arith.constant 0 : index
    %1 = vector.load %arg1[%c48, %c0_1] : memref<56x32xf32, #tpu.memory_space<vmem>>, vector<8x32xf32>
    %c24 = arith.constant 24 : index
    %c0_2 = arith.constant 0 : index
    %2 = vector.load %arg1[%c24, %c0_2] : memref<56x32xf32, #tpu.memory_space<vmem>>, vector<8x32xf32>
    %c32 = arith.constant 32 : index
    %c0_3 = arith.constant 0 : index
    %3 = vector.load %arg1[%c32, %c0_3] : memref<56x32xf32, #tpu.memory_space<vmem>>, vector<1x32xf32>
    %c40 = arith.constant 40 : index
    %c0_4 = arith.constant 0 : index
    %4 = vector.load %arg1[%c40, %c0_4] : memref<56x32xf32, #tpu.memory_space<vmem>>, vector<1x32xf32>
    %c0_5 = arith.constant 0 : index
    %c0_6 = arith.constant 0 : index
    %5 = vector.load %arg0[%c0_5, %c0_6] : memref<8x24xf32, #tpu.memory_space<vmem>>, vector<8x24xf32>
    %cst = arith.constant dense<0.000000e+00> : vector<8x32xf32>
    %6 = tpu.matmul %5, %0, %cst {dimension_numbers = #tpu.dot_dimension_numbers<[1], [0], [0], [1], [0, 0, 1, 1], [], []>} : vector<8x24xf32>, vector<24x32xf32>, vector<8x32xf32> -> vector<8x32xf32>
    %7 = vector.broadcast %3 : vector<1x32xf32> to vector<8x32xf32>
    %8 = arith.addf %6, %7 : vector<8x32xf32>
    %cst_7 = arith.constant 0.000000e+00 : f32
    %9 = vector.broadcast %cst_7 : f32 to vector<1x8xf32>
    %cst_8 = arith.constant 0.000000e+00 : f32
    %10 = vector.broadcast %cst_8 : f32 to vector<1x8xf32>
    %11 = vector.extract_strided_slice %8 {offsets = [0, 0], sizes = [1, 32], strides = [1, 1]} : vector<8x32xf32> to vector<1x32xf32>
    %cst_9 = arith.constant dense<0.000000e+00> : vector<1x32xf32>
    %12 = tpu.matmul %9, %1, %cst_9 {dimension_numbers = #tpu.dot_dimension_numbers<[1], [0], [0], [1], [0, 0, 1, 1], [], []>} : vector<1x8xf32>, vector<8x32xf32>, vector<1x32xf32> -> vector<1x32xf32>
    %13 = arith.addf %11, %12 : vector<1x32xf32>
    %cst_10 = arith.constant 5.000000e-01 : f32
    %14 = vector.broadcast %cst_10 : f32 to vector<1x32xf32>
    %15 = arith.mulf %14, %13 : vector<1x32xf32>
    %16 = math.tanh %15 : vector<1x32xf32>
    %cst_11 = arith.constant 5.000000e-01 : f32
    %17 = vector.broadcast %cst_11 : f32 to vector<1x32xf32>
    %18 = arith.mulf %17, %16 : vector<1x32xf32>
    %cst_12 = arith.constant 5.000000e-01 : f32
    %19 = vector.broadcast %cst_12 : f32 to vector<1x32xf32>
    %20 = arith.addf %18, %19 : vector<1x32xf32>
    %21 = vector.extract_strided_slice %13 {offsets = [0, 16], sizes = [1, 8], strides = [1, 1]} : vector<1x32xf32> to vector<1x8xf32>
    %22 = math.tanh %21 : vector<1x8xf32>
    %23 = vector.extract_strided_slice %20 {offsets = [0, 8], sizes = [1, 8], strides = [1, 1]} : vector<1x32xf32> to vector<1x8xf32>
    %24 = arith.mulf %23, %10 : vector<1x8xf32>
    %25 = vector.extract_strided_slice %20 {offsets = [0, 0], sizes = [1, 8], strides = [1, 1]} : vector<1x32xf32> to vector<1x8xf32>
    %26 = arith.mulf %25, %22 : vector<1x8xf32>
    %27 = arith.addf %24, %26 : vector<1x8xf32>
    %28 = vector.extract_strided_slice %20 {offsets = [0, 24], sizes = [1, 8], strides = [1, 1]} : vector<1x32xf32> to vector<1x8xf32>
    %29 = math.tanh %27 : vector<1x8xf32>
    %30 = arith.mulf %28, %29 : vector<1x8xf32>
    %31 = vector.extract_strided_slice %8 {offsets = [1, 0], sizes = [1, 32], strides = [1, 1]} : vector<8x32xf32> to vector<1x32xf32>
    %cst_13 = arith.constant dense<0.000000e+00> : vector<1x32xf32>
    %32 = tpu.matmul %30, %1, %cst_13 {dimension_numbers = #tpu.dot_dimension_numbers<[1], [0], [0], [1], [0, 0, 1, 1], [], []>} : vector<1x8xf32>, vector<8x32xf32>, vector<1x32xf32> -> vector<1x32xf32>
    %33 = arith.addf %31, %32 : vector<1x32xf32>
    %cst_14 = arith.constant 5.000000e-01 : f32
    %34 = vector.broadcast %cst_14 : f32 to vector<1x32xf32>
    %35 = arith.mulf %34, %33 : vector<1x32xf32>
    %36 = math.tanh %35 : vector<1x32xf32>
    %cst_15 = arith.constant 5.000000e-01 : f32
    %37 = vector.broadcast %cst_15 : f32 to vector<1x32xf32>
    %38 = arith.mulf %37, %36 : vector<1x32xf32>
    %cst_16 = arith.constant 5.000000e-01 : f32
    %39 = vector.broadcast %cst_16 : f32 to vector<1x32xf32>
    %40 = arith.addf %38, %39 : vector<1x32xf32>
    %41 = vector.extract_strided_slice %33 {offsets = [0, 16], sizes = [1, 8], strides = [1, 1]} : vector<1x32xf32> to vector<1x8xf32>
    %42 = math.tanh %41 : vector<1x8xf32>
    %43 = vector.extract_strided_slice %40 {offsets = [0, 8], sizes = [1, 8], strides = [1, 1]} : vector<1x32xf32> to vector<1x8xf32>
    %44 = arith.mulf %43, %27 : vector<1x8xf32>
    %45 = vector.extract_strided_slice %40 {offsets = [0, 0], sizes = [1, 8], strides = [1, 1]} : vector<1x32xf32> to vector<1x8xf32>
    %46 = arith.mulf %45, %42 : vector<1x8xf32>
    %47 = arith.addf %44, %46 : vector<1x8xf32>
    %48 = vector.extract_strided_slice %40 {offsets = [0, 24], sizes = [1, 8], strides = [1, 1]} : vector<1x32xf32> to vector<1x8xf32>
    %49 = math.tanh %47 : vector<1x8xf32>
    %50 = arith.mulf %48, %49 : vector<1x8xf32>
    %51 = vector.extract_strided_slice %8 {offsets = [2, 0], sizes = [1, 32], strides = [1, 1]} : vector<8x32xf32> to vector<1x32xf32>
    %cst_17 = arith.constant dense<0.000000e+00> : vector<1x32xf32>
    %52 = tpu.matmul %50, %1, %cst_17 {dimension_numbers = #tpu.dot_dimension_numbers<[1], [0], [0], [1], [0, 0, 1, 1], [], []>} : vector<1x8xf32>, vector<8x32xf32>, vector<1x32xf32> -> vector<1x32xf32>
    %53 = arith.addf %51, %52 : vector<1x32xf32>
    %cst_18 = arith.constant 5.000000e-01 : f32
    %54 = vector.broadcast %cst_18 : f32 to vector<1x32xf32>
    %55 = arith.mulf %54, %53 : vector<1x32xf32>
    %56 = math.tanh %55 : vector<1x32xf32>
    %cst_19 = arith.constant 5.000000e-01 : f32
    %57 = vector.broadcast %cst_19 : f32 to vector<1x32xf32>
    %58 = arith.mulf %57, %56 : vector<1x32xf32>
    %cst_20 = arith.constant 5.000000e-01 : f32
    %59 = vector.broadcast %cst_20 : f32 to vector<1x32xf32>
    %60 = arith.addf %58, %59 : vector<1x32xf32>
    %61 = vector.extract_strided_slice %53 {offsets = [0, 16], sizes = [1, 8], strides = [1, 1]} : vector<1x32xf32> to vector<1x8xf32>
    %62 = math.tanh %61 : vector<1x8xf32>
    %63 = vector.extract_strided_slice %60 {offsets = [0, 8], sizes = [1, 8], strides = [1, 1]} : vector<1x32xf32> to vector<1x8xf32>
    %64 = arith.mulf %63, %47 : vector<1x8xf32>
    %65 = vector.extract_strided_slice %60 {offsets = [0, 0], sizes = [1, 8], strides = [1, 1]} : vector<1x32xf32> to vector<1x8xf32>
    %66 = arith.mulf %65, %62 : vector<1x8xf32>
    %67 = arith.addf %64, %66 : vector<1x8xf32>
    %68 = vector.extract_strided_slice %60 {offsets = [0, 24], sizes = [1, 8], strides = [1, 1]} : vector<1x32xf32> to vector<1x8xf32>
    %69 = math.tanh %67 : vector<1x8xf32>
    %70 = arith.mulf %68, %69 : vector<1x8xf32>
    %71 = vector.extract_strided_slice %8 {offsets = [3, 0], sizes = [1, 32], strides = [1, 1]} : vector<8x32xf32> to vector<1x32xf32>
    %cst_21 = arith.constant dense<0.000000e+00> : vector<1x32xf32>
    %72 = tpu.matmul %70, %1, %cst_21 {dimension_numbers = #tpu.dot_dimension_numbers<[1], [0], [0], [1], [0, 0, 1, 1], [], []>} : vector<1x8xf32>, vector<8x32xf32>, vector<1x32xf32> -> vector<1x32xf32>
    %73 = arith.addf %71, %72 : vector<1x32xf32>
    %cst_22 = arith.constant 5.000000e-01 : f32
    %74 = vector.broadcast %cst_22 : f32 to vector<1x32xf32>
    %75 = arith.mulf %74, %73 : vector<1x32xf32>
    %76 = math.tanh %75 : vector<1x32xf32>
    %cst_23 = arith.constant 5.000000e-01 : f32
    %77 = vector.broadcast %cst_23 : f32 to vector<1x32xf32>
    %78 = arith.mulf %77, %76 : vector<1x32xf32>
    %cst_24 = arith.constant 5.000000e-01 : f32
    %79 = vector.broadcast %cst_24 : f32 to vector<1x32xf32>
    %80 = arith.addf %78, %79 : vector<1x32xf32>
    %81 = vector.extract_strided_slice %73 {offsets = [0, 16], sizes = [1, 8], strides = [1, 1]} : vector<1x32xf32> to vector<1x8xf32>
    %82 = math.tanh %81 : vector<1x8xf32>
    %83 = vector.extract_strided_slice %80 {offsets = [0, 8], sizes = [1, 8], strides = [1, 1]} : vector<1x32xf32> to vector<1x8xf32>
    %84 = arith.mulf %83, %67 : vector<1x8xf32>
    %85 = vector.extract_strided_slice %80 {offsets = [0, 0], sizes = [1, 8], strides = [1, 1]} : vector<1x32xf32> to vector<1x8xf32>
    %86 = arith.mulf %85, %82 : vector<1x8xf32>
    %87 = arith.addf %84, %86 : vector<1x8xf32>
    %88 = vector.extract_strided_slice %80 {offsets = [0, 24], sizes = [1, 8], strides = [1, 1]} : vector<1x32xf32> to vector<1x8xf32>
    %89 = math.tanh %87 : vector<1x8xf32>
    %90 = arith.mulf %88, %89 : vector<1x8xf32>
    %91 = vector.extract_strided_slice %8 {offsets = [4, 0], sizes = [1, 32], strides = [1, 1]} : vector<8x32xf32> to vector<1x32xf32>
    %cst_25 = arith.constant dense<0.000000e+00> : vector<1x32xf32>
    %92 = tpu.matmul %90, %1, %cst_25 {dimension_numbers = #tpu.dot_dimension_numbers<[1], [0], [0], [1], [0, 0, 1, 1], [], []>} : vector<1x8xf32>, vector<8x32xf32>, vector<1x32xf32> -> vector<1x32xf32>
    %93 = arith.addf %91, %92 : vector<1x32xf32>
    %cst_26 = arith.constant 5.000000e-01 : f32
    %94 = vector.broadcast %cst_26 : f32 to vector<1x32xf32>
    %95 = arith.mulf %94, %93 : vector<1x32xf32>
    %96 = math.tanh %95 : vector<1x32xf32>
    %cst_27 = arith.constant 5.000000e-01 : f32
    %97 = vector.broadcast %cst_27 : f32 to vector<1x32xf32>
    %98 = arith.mulf %97, %96 : vector<1x32xf32>
    %cst_28 = arith.constant 5.000000e-01 : f32
    %99 = vector.broadcast %cst_28 : f32 to vector<1x32xf32>
    %100 = arith.addf %98, %99 : vector<1x32xf32>
    %101 = vector.extract_strided_slice %93 {offsets = [0, 16], sizes = [1, 8], strides = [1, 1]} : vector<1x32xf32> to vector<1x8xf32>
    %102 = math.tanh %101 : vector<1x8xf32>
    %103 = vector.extract_strided_slice %100 {offsets = [0, 8], sizes = [1, 8], strides = [1, 1]} : vector<1x32xf32> to vector<1x8xf32>
    %104 = arith.mulf %103, %87 : vector<1x8xf32>
    %105 = vector.extract_strided_slice %100 {offsets = [0, 0], sizes = [1, 8], strides = [1, 1]} : vector<1x32xf32> to vector<1x8xf32>
    %106 = arith.mulf %105, %102 : vector<1x8xf32>
    %107 = arith.addf %104, %106 : vector<1x8xf32>
    %108 = vector.extract_strided_slice %100 {offsets = [0, 24], sizes = [1, 8], strides = [1, 1]} : vector<1x32xf32> to vector<1x8xf32>
    %109 = math.tanh %107 : vector<1x8xf32>
    %110 = arith.mulf %108, %109 : vector<1x8xf32>
    %111 = vector.extract_strided_slice %8 {offsets = [5, 0], sizes = [1, 32], strides = [1, 1]} : vector<8x32xf32> to vector<1x32xf32>
    %cst_29 = arith.constant dense<0.000000e+00> : vector<1x32xf32>
    %112 = tpu.matmul %110, %1, %cst_29 {dimension_numbers = #tpu.dot_dimension_numbers<[1], [0], [0], [1], [0, 0, 1, 1], [], []>} : vector<1x8xf32>, vector<8x32xf32>, vector<1x32xf32> -> vector<1x32xf32>
    %113 = arith.addf %111, %112 : vector<1x32xf32>
    %cst_30 = arith.constant 5.000000e-01 : f32
    %114 = vector.broadcast %cst_30 : f32 to vector<1x32xf32>
    %115 = arith.mulf %114, %113 : vector<1x32xf32>
    %116 = math.tanh %115 : vector<1x32xf32>
    %cst_31 = arith.constant 5.000000e-01 : f32
    %117 = vector.broadcast %cst_31 : f32 to vector<1x32xf32>
    %118 = arith.mulf %117, %116 : vector<1x32xf32>
    %cst_32 = arith.constant 5.000000e-01 : f32
    %119 = vector.broadcast %cst_32 : f32 to vector<1x32xf32>
    %120 = arith.addf %118, %119 : vector<1x32xf32>
    %121 = vector.extract_strided_slice %113 {offsets = [0, 16], sizes = [1, 8], strides = [1, 1]} : vector<1x32xf32> to vector<1x8xf32>
    %122 = math.tanh %121 : vector<1x8xf32>
    %123 = vector.extract_strided_slice %120 {offsets = [0, 8], sizes = [1, 8], strides = [1, 1]} : vector<1x32xf32> to vector<1x8xf32>
    %124 = arith.mulf %123, %107 : vector<1x8xf32>
    %125 = vector.extract_strided_slice %120 {offsets = [0, 0], sizes = [1, 8], strides = [1, 1]} : vector<1x32xf32> to vector<1x8xf32>
    %126 = arith.mulf %125, %122 : vector<1x8xf32>
    %127 = arith.addf %124, %126 : vector<1x8xf32>
    %128 = vector.extract_strided_slice %120 {offsets = [0, 24], sizes = [1, 8], strides = [1, 1]} : vector<1x32xf32> to vector<1x8xf32>
    %129 = math.tanh %127 : vector<1x8xf32>
    %130 = arith.mulf %128, %129 : vector<1x8xf32>
    %131 = vector.extract_strided_slice %8 {offsets = [6, 0], sizes = [1, 32], strides = [1, 1]} : vector<8x32xf32> to vector<1x32xf32>
    %cst_33 = arith.constant dense<0.000000e+00> : vector<1x32xf32>
    %132 = tpu.matmul %130, %1, %cst_33 {dimension_numbers = #tpu.dot_dimension_numbers<[1], [0], [0], [1], [0, 0, 1, 1], [], []>} : vector<1x8xf32>, vector<8x32xf32>, vector<1x32xf32> -> vector<1x32xf32>
    %133 = arith.addf %131, %132 : vector<1x32xf32>
    %cst_34 = arith.constant 5.000000e-01 : f32
    %134 = vector.broadcast %cst_34 : f32 to vector<1x32xf32>
    %135 = arith.mulf %134, %133 : vector<1x32xf32>
    %136 = math.tanh %135 : vector<1x32xf32>
    %cst_35 = arith.constant 5.000000e-01 : f32
    %137 = vector.broadcast %cst_35 : f32 to vector<1x32xf32>
    %138 = arith.mulf %137, %136 : vector<1x32xf32>
    %cst_36 = arith.constant 5.000000e-01 : f32
    %139 = vector.broadcast %cst_36 : f32 to vector<1x32xf32>
    %140 = arith.addf %138, %139 : vector<1x32xf32>
    %141 = vector.extract_strided_slice %133 {offsets = [0, 16], sizes = [1, 8], strides = [1, 1]} : vector<1x32xf32> to vector<1x8xf32>
    %142 = math.tanh %141 : vector<1x8xf32>
    %143 = vector.extract_strided_slice %140 {offsets = [0, 8], sizes = [1, 8], strides = [1, 1]} : vector<1x32xf32> to vector<1x8xf32>
    %144 = arith.mulf %143, %127 : vector<1x8xf32>
    %145 = vector.extract_strided_slice %140 {offsets = [0, 0], sizes = [1, 8], strides = [1, 1]} : vector<1x32xf32> to vector<1x8xf32>
    %146 = arith.mulf %145, %142 : vector<1x8xf32>
    %147 = arith.addf %144, %146 : vector<1x8xf32>
    %148 = vector.extract_strided_slice %140 {offsets = [0, 24], sizes = [1, 8], strides = [1, 1]} : vector<1x32xf32> to vector<1x8xf32>
    %149 = math.tanh %147 : vector<1x8xf32>
    %150 = arith.mulf %148, %149 : vector<1x8xf32>
    %151 = vector.extract_strided_slice %8 {offsets = [7, 0], sizes = [1, 32], strides = [1, 1]} : vector<8x32xf32> to vector<1x32xf32>
    %cst_37 = arith.constant dense<0.000000e+00> : vector<1x32xf32>
    %152 = tpu.matmul %150, %1, %cst_37 {dimension_numbers = #tpu.dot_dimension_numbers<[1], [0], [0], [1], [0, 0, 1, 1], [], []>} : vector<1x8xf32>, vector<8x32xf32>, vector<1x32xf32> -> vector<1x32xf32>
    %153 = arith.addf %151, %152 : vector<1x32xf32>
    %cst_38 = arith.constant 5.000000e-01 : f32
    %154 = vector.broadcast %cst_38 : f32 to vector<1x32xf32>
    %155 = arith.mulf %154, %153 : vector<1x32xf32>
    %156 = math.tanh %155 : vector<1x32xf32>
    %cst_39 = arith.constant 5.000000e-01 : f32
    %157 = vector.broadcast %cst_39 : f32 to vector<1x32xf32>
    %158 = arith.mulf %157, %156 : vector<1x32xf32>
    %cst_40 = arith.constant 5.000000e-01 : f32
    %159 = vector.broadcast %cst_40 : f32 to vector<1x32xf32>
    %160 = arith.addf %158, %159 : vector<1x32xf32>
    %161 = vector.extract_strided_slice %153 {offsets = [0, 16], sizes = [1, 8], strides = [1, 1]} : vector<1x32xf32> to vector<1x8xf32>
    %162 = math.tanh %161 : vector<1x8xf32>
    %163 = vector.extract_strided_slice %160 {offsets = [0, 8], sizes = [1, 8], strides = [1, 1]} : vector<1x32xf32> to vector<1x8xf32>
    %164 = arith.mulf %163, %147 : vector<1x8xf32>
    %165 = vector.extract_strided_slice %160 {offsets = [0, 0], sizes = [1, 8], strides = [1, 1]} : vector<1x32xf32> to vector<1x8xf32>
    %166 = arith.mulf %165, %162 : vector<1x8xf32>
    %167 = arith.addf %164, %166 : vector<1x8xf32>
    %168 = vector.extract_strided_slice %160 {offsets = [0, 24], sizes = [1, 8], strides = [1, 1]} : vector<1x32xf32> to vector<1x8xf32>
    %169 = math.tanh %167 : vector<1x8xf32>
    %170 = arith.mulf %168, %169 : vector<1x8xf32>
    %171 = tpu.concatenate %30, %50, %70, %90, %110, %130, %150, %170 in 0 : vector<1x8xf32>, vector<1x8xf32>, vector<1x8xf32>, vector<1x8xf32>, vector<1x8xf32>, vector<1x8xf32>, vector<1x8xf32>, vector<1x8xf32> -> vector<8x8xf32>
    %cst_41 = arith.constant dense<0.000000e+00> : vector<8x32xf32>
    %172 = tpu.matmul %171, %2, %cst_41 {dimension_numbers = #tpu.dot_dimension_numbers<[1], [0], [0], [1], [0, 0, 1, 1], [], []>} : vector<8x8xf32>, vector<8x32xf32>, vector<8x32xf32> -> vector<8x32xf32>
    %173 = vector.broadcast %4 : vector<1x32xf32> to vector<8x32xf32>
    %174 = arith.addf %172, %173 : vector<8x32xf32>
    %cst_42 = arith.constant 5.000000e-01 : f32
    %175 = vector.broadcast %cst_42 : f32 to vector<8x32xf32>
    %176 = arith.mulf %175, %174 : vector<8x32xf32>
    %177 = math.tanh %176 : vector<8x32xf32>
    %cst_43 = arith.constant 5.000000e-01 : f32
    %178 = vector.broadcast %cst_43 : f32 to vector<8x32xf32>
    %179 = arith.mulf %178, %177 : vector<8x32xf32>
    %cst_44 = arith.constant 5.000000e-01 : f32
    %180 = vector.broadcast %cst_44 : f32 to vector<8x32xf32>
    %181 = arith.addf %179, %180 : vector<8x32xf32>
    %c0_45 = arith.constant 0 : index
    %c0_46 = arith.constant 0 : index
    %182 = vector.load %arg2[%c0_45, %c0_46] : memref<8x32xf32, #tpu.memory_space<vmem>>, vector<8x32xf32>
    tpu.vector_store %arg2[%c0_45, %c0_46], %181 {strides = array<i32>} : memref<8x32xf32, #tpu.memory_space<vmem>>, vector<8x32xf32>,
    %cst_47 = arith.constant 0.000000e+00 : f32
    %183 = vector.broadcast %cst_47 : f32 to vector<1x16xf32>
    %184 = tpu.concatenate %170, %167, %183 in 1 : vector<1x8xf32>, vector<1x8xf32>, vector<1x16xf32> -> vector<1x32xf32>
    %c0_48 = arith.constant 0 : index
    %c0_49 = arith.constant 0 : index
    %185 = vector.load %arg3[%c0_48, %c0_49] : memref<1x32xf32, #tpu.memory_space<vmem>>, vector<1x32xf32>
    tpu.vector_store %arg3[%c0_48, %c0_49], %184 {strides = array<i32>} : memref<1x32xf32, #tpu.memory_space<vmem>>, vector<1x32xf32>,
    return
  }
}

</mosaic_0001>

<llo_original>
// kernel: lstm_model_forward_sequence.1
$region0: #{lstm_model_forward_sequence.1}
  #allocation0 [shape = 'u32[]', space=smem, size = 0x4, offset = 0x4, fixed_abs, tag = 'smem constant byte address 0x4 - core index']
  #allocation1 [shape = 'u32[72,128]{1,0:T(1,128)}', space=vmem, size = 0x9000, scoped, tag = 'internal scratch']
  %s0 = inlined_call_operand.vmem [shape: f32[8,24], index: 0, kind: input, shape index: {}]
  %s1 = inlined_call_operand.vmem [shape: f32[56,32], index: 1, kind: input, shape index: {}]
  %s2 = inlined_call_operand.vmem [shape: f32[8,32], index: 2, kind: output, shape index: {0}]
  %s3 = inlined_call_operand.vmem [shape: f32[1,32], index: 3, kind: output, shape index: {1}]
  %4 = xla_tuple %s2, %s3
  %s5 = sld [smem:[#allocation0]]
  $region26: #{lstm_model_forward_sequence.1} parent=0
    _
  %s7 = ssub.s32 1, %s5
  %s8 = scalar_select 0, %s7, %s5
  // Predicated region
  $region2: #{lstm_model_forward_sequence.1} parent=0 // pred_check
    _
  $region3: #{lstm_model_forward_sequence.1} parent=0 // pred_check_branch
    %10 = sbr.rel (0) target = $region5
  $region4: #{lstm_model_forward_sequence.1} parent=0 // pred_region
    _
  $region5: #{lstm_model_forward_sequence.1} parent=0 // pred_fallthru
    _
  // Predicated region
  $region6: #{lstm_model_forward_sequence.1} parent=0 // pred_check
    _
  $region7: #{lstm_model_forward_sequence.1} parent=0 // pred_check_branch
    %12 = sbr.rel (0) target = $region9
  $region8: #{lstm_model_forward_sequence.1} parent=0 // pred_region
    _
  $region9: #{lstm_model_forward_sequence.1} parent=0 // pred_fallthru
    _
  %v13 = vld [vmem:[%s1] sm:$0xff]
  %v14 = vld [vmem:[%s1 + $0x8] sm:$0xff]
  %v15 = vld [vmem:[%s1 + $0x10] sm:$0xff]
  %v16 = vld [vmem:[%s1 + $0x30] sm:$0xff]
  %v17 = vld [vmem:[%s1 + $0x18] sm:$0xff]
  %v18 = vld [vmem:[%s1 + $0x20] sm:$0x1]
  %v19 = vld [vmem:[%s1 + $0x28] sm:$0x1]
  %v20 = vld [vmem:[%s0] sm:$0xff]
  %v21 = vperm.slane %v18, 0
  %vm22 = vcmask 195584
  %v24 = vsel %vm22, %v20, 0
  %26 = vmatpush.msra.mxu0 0.0
  %27 = vmatpush.msra.mxu0 0.0
  %28 = vmatpush.msra.mxu0 0.0
  %29 = vmatpush.msra.mxu0 0.0
  %30 = vmatpush.msra.mxu0 0.0
  %31 = vmatpush.msra.mxu0 0.0
  %32 = vmatpush.msra.mxu0 0.0
  %33 = vmatpush.msra.mxu0 0.0
  %34 = vmatpush.msra.mxu0 0.0
  %35 = vmatpush.msra.mxu0 0.0
  %36 = vmatpush.msra.mxu0 0.0
  %37 = vmatpush.msra.mxu0 0.0
  %38 = vmatpush.msra.mxu0 0.0
  %39 = vmatpush.msra.mxu0 %v15
  %40 = vmatpush.msra.mxu0 %v14
  %41 = vmatpush.msra.mxu0 %v13
  %42 = vmatmul.f32.gmra.mxu0 %v24
  %v43 = vpop.f32.mrf.mxu0
  %v44 = vadd.f32 %v21, %v43
  %45 = vdwg.mxu0
  %vm46 = vcmask 64512
  %v48 = vsel %vm46, 0.0, 0
  %50 = vmatpush.msra.mxu0 0.0
  %51 = vmatpush.msra.mxu0 0.0
  %52 = vmatpush.msra.mxu0 0.0
  %53 = vmatpush.msra.mxu0 0.0
  %54 = vmatpush.msra.mxu0 0.0
  %55 = vmatpush.msra.mxu0 0.0
  %56 = vmatpush.msra.mxu0 0.0
  %57 = vmatpush.msra.mxu0 0.0
  %58 = vmatpush.msra.mxu0 0.0
  %59 = vmatpush.msra.mxu0 0.0
  %60 = vmatpush.msra.mxu0 0.0
  %61 = vmatpush.msra.mxu0 0.0
  %62 = vmatpush.msra.mxu0 0.0
  %63 = vmatpush.msra.mxu0 0.0
  %64 = vmatpush.msra.mxu0 0.0
  %65 = vmatpush.msra.mxu0 %v16
  %66 = vmatmul.f32.gmra.mxu0 %v48
  %v67 = vpop.f32.mrf.mxu0
  %v68 = vadd.f32 0.0, %v67
  %69 = vdwg.mxu0
  %v70 = vadd.f32 %v44, %v68
  %v71 = vmul.f32 %v70, 0.5
  %v72 = vtanh.pop %v71
  %v73 = vmul.f32 %v72, 0.5
  %v74 = vadd.f32 %v73, 0.5
  %v75 = vtanh.pop %v70
  %v76 = vmul.f32 %v74, 0.0
  %78 = vrot.lane.b32.xlu0 %v75, 112
  %v79 = vpop.permute.xlu0 %78
  %v81 = vmul.f32 %v74, %v79
  %83 = vrot.lane.b32.xlu0 %v81, 8
  %v84 = vpop.permute.xlu0 %83
  %v86 = vadd.f32 %v76, %v84
  %v87 = vtanh.pop %v86
  %89 = vrot.lane.b32.xlu0 %v87, 16
  %v90 = vpop.permute.xlu0 %89
  %v92 = vmul.f32 %v74, %v90
  %94 = vrot.lane.b32.xlu0 %v92, 104
  %v95 = vpop.permute.xlu0 %94
  %v96 = vsel %vm46, %v95, 0
  %98 = vmatpush.msra.mxu0 0.0
  %99 = vmatpush.msra.mxu0 0.0
  %100 = vmatpush.msra.mxu0 0.0
  %101 = vmatpush.msra.mxu0 0.0
  %102 = vmatpush.msra.mxu0 0.0
  %103 = vmatpush.msra.mxu0 0.0
  %104 = vmatpush.msra.mxu0 0.0
  %105 = vmatpush.msra.mxu0 0.0
  %106 = vmatpush.msra.mxu0 0.0
  %107 = vmatpush.msra.mxu0 0.0
  %108 = vmatpush.msra.mxu0 0.0
  %109 = vmatpush.msra.mxu0 0.0
  %110 = vmatpush.msra.mxu0 0.0
  %111 = vmatpush.msra.mxu0 0.0
  %112 = vmatpush.msra.mxu0 0.0
  %113 = vmatpush.msra.mxu0 %v16
  %114 = vmatmul.f32.gmra.mxu0 %v96
  %v115 = vpop.f32.mrf.mxu0
  %v116 = vadd.f32 0.0, %v115
  %117 = vdwg.mxu0
  %v119 = vrot.slane %v116, 7
  %v121 = vadd.f32 %v44, %v119
  %v122 = vmul.f32 %v121, 0.5
  %v123 = vtanh.pop %v122
  %v124 = vmul.f32 %v123, 0.5
  %v125 = vadd.f32 %v124, 0.5
  %v126 = vtanh.pop %v121
  %v128 = vrot.slane %v86, 7
  %v130 = vmul.f32 %v125, %v128
  %132 = vrot.lane.b32.xlu0 %v126, 112
  %v133 = vpop.permute.xlu0 %132
  %v135 = vmul.f32 %v125, %v133
  %137 = vrot.lane.b32.xlu0 %v135, 8
  %v138 = vpop.permute.xlu0 %137
  %v140 = vadd.f32 %v130, %v138
  %v141 = vtanh.pop %v140
  %143 = vrot.lane.b32.xlu0 %v141, 16
  %v144 = vpop.permute.xlu0 %143
  %v146 = vmul.f32 %v125, %v144
  %v148 = vrot.slane %v146, 1
  %149 = vrot.lane.b32.xlu0 %v148, 104
  %v150 = vpop.permute.xlu0 %149
  %v151 = vsel %vm46, %v150, 0
  %153 = vmatpush.msra.mxu0 0.0
  %154 = vmatpush.msra.mxu0 0.0
  %155 = vmatpush.msra.mxu0 0.0
  %156 = vmatpush.msra.mxu0 0.0
  %157 = vmatpush.msra.mxu0 0.0
  %158 = vmatpush.msra.mxu0 0.0
  %159 = vmatpush.msra.mxu0 0.0
  %160 = vmatpush.msra.mxu0 0.0
  %161 = vmatpush.msra.mxu0 0.0
  %162 = vmatpush.msra.mxu0 0.0
  %163 = vmatpush.msra.mxu0 0.0
  %164 = vmatpush.msra.mxu0 0.0
  %165 = vmatpush.msra.mxu0 0.0
  %166 = vmatpush.msra.mxu0 0.0
  %167 = vmatpush.msra.mxu0 0.0
  %168 = vmatpush.msra.mxu0 %v16
  %169 = vmatmul.f32.gmra.mxu0 %v151
  %v170 = vpop.f32.mrf.mxu0
  %v171 = vadd.f32 0.0, %v170
  %172 = vdwg.mxu0
  %v174 = vrot.slane %v171, 6
  %v176 = vadd.f32 %v44, %v174
  %v177 = vmul.f32 %v176, 0.5
  %v178 = vtanh.pop %v177
  %v179 = vmul.f32 %v178, 0.5
  %v180 = vadd.f32 %v179, 0.5
  %v181 = vtanh.pop %v176
  %v183 = vrot.slane %v140, 7
  %v185 = vmul.f32 %v180, %v183
  %187 = vrot.lane.b32.xlu0 %v181, 112
  %v188 = vpop.permute.xlu0 %187
  %v190 = vmul.f32 %v180, %v188
  %192 = vrot.lane.b32.xlu0 %v190, 8
  %v193 = vpop.permute.xlu0 %192
  %v195 = vadd.f32 %v185, %v193
  %v196 = vtanh.pop %v195
  %198 = vrot.lane.b32.xlu0 %v196, 16
  %v199 = vpop.permute.xlu0 %198
  %v201 = vmul.f32 %v180, %v199
  %v203 = vrot.slane %v201, 2
  %204 = vrot.lane.b32.xlu0 %v203, 104
  %v205 = vpop.permute.xlu0 %204
  %v206 = vsel %vm46, %v205, 0
  %208 = vmatpush.msra.mxu0 0.0
  %209 = vmatpush.msra.mxu0 0.0
  %210 = vmatpush.msra.mxu0 0.0
  %211 = vmatpush.msra.mxu0 0.0
  %212 = vmatpush.msra.mxu0 0.0
  %213 = vmatpush.msra.mxu0 0.0
  %214 = vmatpush.msra.mxu0 0.0
  %215 = vmatpush.msra.mxu0 0.0
  %216 = vmatpush.msra.mxu0 0.0
  %217 = vmatpush.msra.mxu0 0.0
  %218 = vmatpush.msra.mxu0 0.0
  %219 = vmatpush.msra.mxu0 0.0
  %220 = vmatpush.msra.mxu0 0.0
  %221 = vmatpush.msra.mxu0 0.0
  %222 = vmatpush.msra.mxu0 0.0
  %223 = vmatpush.msra.mxu0 %v16
  %224 = vmatmul.f32.gmra.mxu0 %v206
  %v225 = vpop.f32.mrf.mxu0
  %v226 = vadd.f32 0.0, %v225
  %227 = vdwg.mxu0
  %v229 = vrot.slane %v226, 5
  %v231 = vadd.f32 %v44, %v229
  %v232 = vmul.f32 %v231, 0.5
  %v233 = vtanh.pop %v232
  %v234 = vmul.f32 %v233, 0.5
  %v235 = vadd.f32 %v234, 0.5
  %v236 = vtanh.pop %v231
  %v238 = vrot.slane %v195, 7
  %v240 = vmul.f32 %v235, %v238
  %242 = vrot.lane.b32.xlu0 %v236, 112
  %v243 = vpop.permute.xlu0 %242
  %v245 = vmul.f32 %v235, %v243
  %247 = vrot.lane.b32.xlu0 %v245, 8
  %v248 = vpop.permute.xlu0 %247
  %v250 = vadd.f32 %v240, %v248
  %v251 = vtanh.pop %v250
  %253 = vrot.lane.b32.xlu0 %v251, 16
  %v254 = vpop.permute.xlu0 %253
  %v256 = vmul.f32 %v235, %v254
  %v258 = vrot.slane %v256, 3
  %259 = vrot.lane.b32.xlu0 %v258, 104
  %v260 = vpop.permute.xlu0 %259
  %v261 = vsel %vm46, %v260, 0
  %263 = vmatpush.msra.mxu0 0.0
  %264 = vmatpush.msra.mxu0 0.0
  %265 = vmatpush.msra.mxu0 0.0
  %266 = vmatpush.msra.mxu0 0.0
  %267 = vmatpush.msra.mxu0 0.0
  %268 = vmatpush.msra.mxu0 0.0
  %269 = vmatpush.msra.mxu0 0.0
  %270 = vmatpush.msra.mxu0 0.0
  %271 = vmatpush.msra.mxu0 0.0
  %272 = vmatpush.msra.mxu0 0.0
  %273 = vmatpush.msra.mxu0 0.0
  %274 = vmatpush.msra.mxu0 0.0
  %275 = vmatpush.msra.mxu0 0.0
  %276 = vmatpush.msra.mxu0 0.0
  %277 = vmatpush.msra.mxu0 0.0
  %278 = vmatpush.msra.mxu0 %v16
  %279 = vmatmul.f32.gmra.mxu0 %v261
  %v280 = vpop.f32.mrf.mxu0
  %v281 = vadd.f32 0.0, %v280
  %282 = vdwg.mxu0
  %v284 = vrot.slane %v281, 4
  %v286 = vadd.f32 %v44, %v284
  %v287 = vmul.f32 %v286, 0.5
  %v288 = vtanh.pop %v287
  %v289 = vmul.f32 %v288, 0.5
  %v290 = vadd.f32 %v289, 0.5
  %v291 = vtanh.pop %v286
  %v293 = vrot.slane %v250, 7
  %v295 = vmul.f32 %v290, %v293
  %297 = vrot.lane.b32.xlu0 %v291, 112
  %v298 = vpop.permute.xlu0 %297
  %v300 = vmul.f32 %v290, %v298
  %302 = vrot.lane.b32.xlu0 %v300, 8
  %v303 = vpop.permute.xlu0 %302
  %v305 = vadd.f32 %v295, %v303
  %v306 = vtanh.pop %v305
  %308 = vrot.lane.b32.xlu0 %v306, 16
  %v309 = vpop.permute.xlu0 %308
  %v311 = vmul.f32 %v290, %v309
  %v313 = vrot.slane %v311, 4
  %314 = vrot.lane.b32.xlu0 %v313, 104
  %v315 = vpop.permute.xlu0 %314
  %v316 = vsel %vm46, %v315, 0
  %318 = vmatpush.msra.mxu0 0.0
  %319 = vmatpush.msra.mxu0 0.0
  %320 = vmatpush.msra.mxu0 0.0
  %321 = vmatpush.msra.mxu0 0.0
  %322 = vmatpush.msra.mxu0 0.0
  %323 = vmatpush.msra.mxu0 0.0
  %324 = vmatpush.msra.mxu0 0.0
  %325 = vmatpush.msra.mxu0 0.0
  %326 = vmatpush.msra.mxu0 0.0
  %327 = vmatpush.msra.mxu0 0.0
  %328 = vmatpush.msra.mxu0 0.0
  %329 = vmatpush.msra.mxu0 0.0
  %330 = vmatpush.msra.mxu0 0.0
  %331 = vmatpush.msra.mxu0 0.0
  %332 = vmatpush.msra.mxu0 0.0
  %333 = vmatpush.msra.mxu0 %v16
  %334 = vmatmul.f32.gmra.mxu0 %v316
  %v335 = vpop.f32.mrf.mxu0
  %v336 = vadd.f32 0.0, %v335
  %337 = vdwg.mxu0
  %v339 = vrot.slane %v336, 3
  %v341 = vadd.f32 %v44, %v339
  %v342 = vmul.f32 %v341, 0.5
  %v343 = vtanh.pop %v342
  %v344 = vmul.f32 %v343, 0.5
  %v345 = vadd.f32 %v344, 0.5
  %v346 = vtanh.pop %v341
  %v348 = vrot.slane %v305, 7
  %v350 = vmul.f32 %v345, %v348
  %352 = vrot.lane.b32.xlu0 %v346, 112
  %v353 = vpop.permute.xlu0 %352
  %v355 = vmul.f32 %v345, %v353
  %357 = vrot.lane.b32.xlu0 %v355, 8
  %v358 = vpop.permute.xlu0 %357
  %v360 = vadd.f32 %v350, %v358
  %v361 = vtanh.pop %v360
  %363 = vrot.lane.b32.xlu0 %v361, 16
  %v364 = vpop.permute.xlu0 %363
  %v366 = vmul.f32 %v345, %v364
  %v368 = vrot.slane %v366, 5
  %369 = vrot.lane.b32.xlu0 %v368, 104
  %v370 = vpop.permute.xlu0 %369
  %v371 = vsel %vm46, %v370, 0
  %373 = vmatpush.msra.mxu0 0.0
  %374 = vmatpush.msra.mxu0 0.0
  %375 = vmatpush.msra.mxu0 0.0
  %376 = vmatpush.msra.mxu0 0.0
  %377 = vmatpush.msra.mxu0 0.0
  %378 = vmatpush.msra.mxu0 0.0
  %379 = vmatpush.msra.mxu0 0.0
  %380 = vmatpush.msra.mxu0 0.0
  %381 = vmatpush.msra.mxu0 0.0
  %382 = vmatpush.msra.mxu0 0.0
  %383 = vmatpush.msra.mxu0 0.0
  %384 = vmatpush.msra.mxu0 0.0
  %385 = vmatpush.msra.mxu0 0.0
  %386 = vmatpush.msra.mxu0 0.0
  %387 = vmatpush.msra.mxu0 0.0
  %388 = vmatpush.msra.mxu0 %v16
  %389 = vmatmul.f32.gmra.mxu0 %v371
  %v390 = vpop.f32.mrf.mxu0
  %v391 = vadd.f32 0.0, %v390
  %392 = vdwg.mxu0
  %v394 = vrot.slane %v391, 2
  %v396 = vadd.f32 %v44, %v394
  %v397 = vmul.f32 %v396, 0.5
  %v398 = vtanh.pop %v397
  %v399 = vmul.f32 %v398, 0.5
  %v400 = vadd.f32 %v399, 0.5
  %v401 = vtanh.pop %v396
  %v403 = vrot.slane %v360, 7
  %v405 = vmul.f32 %v400, %v403
  %407 = vrot.lane.b32.xlu0 %v401, 112
  %v408 = vpop.permute.xlu0 %407
  %v410 = vmul.f32 %v400, %v408
  %412 = vrot.lane.b32.xlu0 %v410, 8
  %v413 = vpop.permute.xlu0 %412
  %v415 = vadd.f32 %v405, %v413
  %v416 = vtanh.pop %v415
  %418 = vrot.lane.b32.xlu0 %v416, 16
  %v419 = vpop.permute.xlu0 %418
  %v421 = vmul.f32 %v400, %v419
  %v423 = vrot.slane %v421, 6
  %424 = vrot.lane.b32.xlu0 %v423, 104
  %v425 = vpop.permute.xlu0 %424
  %v426 = vsel %vm46, %v425, 0
  %428 = vmatpush.msra.mxu0 0.0
  %429 = vmatpush.msra.mxu0 0.0
  %430 = vmatpush.msra.mxu0 0.0
  %431 = vmatpush.msra.mxu0 0.0
  %432 = vmatpush.msra.mxu0 0.0
  %433 = vmatpush.msra.mxu0 0.0
  %434 = vmatpush.msra.mxu0 0.0
  %435 = vmatpush.msra.mxu0 0.0
  %436 = vmatpush.msra.mxu0 0.0
  %437 = vmatpush.msra.mxu0 0.0
  %438 = vmatpush.msra.mxu0 0.0
  %439 = vmatpush.msra.mxu0 0.0
  %440 = vmatpush.msra.mxu0 0.0
  %441 = vmatpush.msra.mxu0 0.0
  %442 = vmatpush.msra.mxu0 0.0
  %443 = vmatpush.msra.mxu0 %v16
  %444 = vmatmul.f32.gmra.mxu0 %v426
  %v445 = vpop.f32.mrf.mxu0
  %v446 = vadd.f32 0.0, %v445
  %447 = vdwg.mxu0
  %v449 = vrot.slane %v446, 1
  %v451 = vadd.f32 %v44, %v449
  %v452 = vmul.f32 %v451, 0.5
  %v453 = vtanh.pop %v452
  %v454 = vmul.f32 %v453, 0.5
  %v455 = vadd.f32 %v454, 0.5
  %v456 = vtanh.pop %v451
  %v458 = vrot.slane %v415, 7
  %v460 = vmul.f32 %v455, %v458
  %462 = vrot.lane.b32.xlu0 %v456, 112
  %v463 = vpop.permute.xlu0 %462
  %v465 = vmul.f32 %v455, %v463
  %467 = vrot.lane.b32.xlu0 %v465, 8
  %v468 = vpop.permute.xlu0 %467
  %v470 = vadd.f32 %v460, %v468
  %v471 = vtanh.pop %v470
  %473 = vrot.lane.b32.xlu0 %v471, 16
  %v474 = vpop.permute.xlu0 %473
  %v476 = vmul.f32 %v455, %v474
  %vm477 = vcmask 1040384
  %v478 = vsel %vm477, %v92, %v146
  %vm479 = vcmask 1041408
  %v480 = vsel %vm479, %v478, %v201
  %vm481 = vcmask 1042432
  %v482 = vsel %vm481, %v480, %v256
  %vm483 = vcmask 1043456
  %v484 = vsel %vm483, %v482, %v311
  %vm485 = vcmask 1044480
  %v486 = vsel %vm485, %v484, %v366
  %vm487 = vcmask 1045504
  %v488 = vsel %vm487, %v486, %v421
  %vm489 = vcmask 1046528
  %v490 = vsel %vm489, %v488, %v476
  %v491 = vperm.slane %v19, 0
  %493 = vrot.lane.b32.xlu0 %v490, 104
  %v494 = vpop.permute.xlu0 %493
  %v495 = vsel %vm46, %v494, 0
  %497 = vmatpush.msra.mxu0 0.0
  %498 = vmatpush.msra.mxu0 0.0
  %499 = vmatpush.msra.mxu0 0.0
  %500 = vmatpush.msra.mxu0 0.0
  %501 = vmatpush.msra.mxu0 0.0
  %502 = vmatpush.msra.mxu0 0.0
  %503 = vmatpush.msra.mxu0 0.0
  %504 = vmatpush.msra.mxu0 0.0
  %505 = vmatpush.msra.mxu0 0.0
  %506 = vmatpush.msra.mxu0 0.0
  %507 = vmatpush.msra.mxu0 0.0
  %508 = vmatpush.msra.mxu0 0.0
  %509 = vmatpush.msra.mxu0 0.0
  %510 = vmatpush.msra.mxu0 0.0
  %511 = vmatpush.msra.mxu0 0.0
  %512 = vmatpush.msra.mxu0 %v17
  %513 = vmatmul.f32.gmra.mxu0 %v495
  %v514 = vpop.f32.mrf.mxu0
  %v515 = vadd.f32 %v491, %v514
  %516 = vdwg.mxu0
  %v517 = vmul.f32 %v515, 0.5
  %v518 = vtanh.pop %v517
  %v519 = vmul.f32 %v518, 0.5
  %v520 = vadd.f32 %v519, 0.5
  %vm521 = vcmask 261120
  %522 = vst.msk [vmem:[%s2] sm:$0xff] %vm521, %v520
  %524 = vrot.lane.b32.xlu0 %v476, 104
  %v525 = vpop.permute.xlu0 %524
  %v527 = vsel %vm46, %v525, %v470
  %vm528 = vcmask 130048
  %v529 = vsel %vm528, %v527, 0.0
  %vm530 = vcmask 261127
  %531 = vst.msk [vmem:[%s3 - $0x7] sm:$0x80] %vm530, %v529
  // Predicated region
  $region10: #{lstm_model_forward_sequence.1} parent=0 // pred_check
    _
  $region11: #{lstm_model_forward_sequence.1} parent=0 // pred_check_branch
    %533 = sbr.rel (0) target = $region13
  $region12: #{lstm_model_forward_sequence.1} parent=0 // pred_region
    _
  $region13: #{lstm_model_forward_sequence.1} parent=0 // pred_fallthru
    _
  // Predicated region
  $region14: #{lstm_model_forward_sequence.1} parent=0 // pred_check
    _
  $region15: #{lstm_model_forward_sequence.1} parent=0 // pred_check_branch
    %535 = sbr.rel (0) target = $region17
  $region16: #{lstm_model_forward_sequence.1} parent=0 // pred_region
    _
  $region17: #{lstm_model_forward_sequence.1} parent=0 // pred_fallthru
    _
  // Predicated region
  $region18: #{lstm_model_forward_sequence.1} parent=0 // pred_check
    _
  $region19: #{lstm_model_forward_sequence.1} parent=0 // pred_check_branch
    %537 = sbr.rel (0) target = $region21
  $region20: #{lstm_model_forward_sequence.1} parent=0 // pred_region
    _
  $region21: #{lstm_model_forward_sequence.1} parent=0 // pred_fallthru
    _
  // Predicated region
  $region22: #{lstm_model_forward_sequence.1} parent=0 // pred_check
    _
  $region23: #{lstm_model_forward_sequence.1} parent=0 // pred_check_branch
    %539 = sbr.rel (0) target = $region25
  $region24: #{lstm_model_forward_sequence.1} parent=0 // pred_region
    _
  $region25: #{lstm_model_forward_sequence.1} parent=0 // pred_fallthru
    _

</llo_original>
